<compile_context>
chip_gen: v5e
topology: v5e:2x2
jax: 0.10.0
libtpu: 0.0.40
codegen_flags: <defaults>
</compile_context>

<pallas_src>
import functools

import jax
import jax.numpy as jnp
from jax.experimental import pallas as pl
from jax.experimental.pallas import tpu as pltpu

ACTION_SIZE = 15
STATE_SIZE = 47
H1, H2, H3 = 512, 256, 128
F_PAD = 128                  # state features zero-padded to one full lane width
HEAD = 1 + ACTION_SIZE       # fused value|policy head -> 16 real output columns
HEAD_PAD = 128               # head padded to a full lane width for unmasked stores
DEFAULT_BLOCK_B = 512        # ~1.5 MiB of f32 activations per tile; v7x-safe


def _round_up(n, m):
    return ((n + m - 1) // m) * m


def xam_loc_solo_kernel(
    x_ref,
    w1_ref, b1_ref,
    w2_ref, b2_ref,
    w3_ref, b3_ref,
    wh_ref, bh_ref,
    out_ref,
):
    # x is already bf16 and lane-aligned ([TB, 128]); no extra cast needed.
    x = x_ref[...]

    h = jnp.dot(x, w1_ref[...], preferred_element_type=jnp.float32) + b1_ref[...]
    h = jnp.maximum(h, 0.0).astype(jnp.bfloat16)                     # [TB, 512]

    h = jnp.dot(h, w2_ref[...], preferred_element_type=jnp.float32) + b2_ref[...]
    h = jnp.maximum(h, 0.0).astype(jnp.bfloat16)                     # [TB, 256]

    h = jnp.dot(h, w3_ref[...], preferred_element_type=jnp.float32) + b3_ref[...]
    h = jnp.maximum(h, 0.0).astype(jnp.bfloat16)                     # [TB, 128]

    # Fused, lane-padded value|policy head: one [TB, 128] matmul, unmasked
    # full-lane store.  Columns >= 16 are zero-weight padding.
    out = jnp.dot(h, wh_ref[...], preferred_element_type=jnp.float32) + bh_ref[...]
    out_ref[...] = out.astype(out_ref.dtype)                         # [TB, 128]


def prepare_params(params):
    """One-time parameter prep: pad w1 to K=128, fuse+pad heads, cast to bf16."""
    w1 = jnp.zeros((F_PAD, H1), jnp.float32).at[:STATE_SIZE, :].set(params["w1"])
    # Fused head: [value | policy | zero-pad] -> [H3, 128]
    wh = jnp.zeros((H3, HEAD_PAD), jnp.float32)
    wh = wh.at[:, :1].set(params["wv"]).at[:, 1:HEAD].set(params["wp"])
    bh = jnp.zeros((1, HEAD_PAD), jnp.float32)
    bh = bh.at[:, :1].set(params["bv"]).at[:, 1:HEAD].set(params["bp"])
    return {
        "w1": w1.astype(jnp.bfloat16),
        "w2": params["w2"].astype(jnp.bfloat16),
        "w3": params["w3"].astype(jnp.bfloat16),
        "wh": wh.astype(jnp.bfloat16),
        # biases stay f32; added after f32 accumulation.
        "b1": params["b1"],
        "b2": params["b2"],
        "b3": params["b3"],
        "bh": bh,
    }


@functools.partial(jax.jit, static_argnames=("block_b",))
def xam_loc_solo_forward(x, prepared, block_b=DEFAULT_BLOCK_B):
    """Full MLP forward in one batch-tiled Pallas kernel.

    Args:
      x: [B, STATE_SIZE] float32.
      prepared: output of prepare_params().
      block_b: batch tile size (rows per grid step).

    Returns:
      (value [B, 1], policy [B, ACTION_SIZE]) float32.
    """
    B = x.shape[0]
    tb = min(block_b, _round_up(B, 8))      # small batches: one aligned tile
    b_pad = _round_up(B, tb)

    # Pad once host-side: batch -> multiple of tb, features 47 -> 128 (zeros),
    # cast to bf16 for native MXU rate.
    xp = jnp.zeros((b_pad, F_PAD), jnp.bfloat16)
    xp = xp.at[:B, :STATE_SIZE].set(x.astype(jnp.bfloat16))

    grid = (b_pad // tb,)

    # Weights/biases: constant index_map -> fetched once, resident across the
    # batch grid (no per-step re-DMA).
    def const(shape):
        return pl.BlockSpec(shape, lambda i: (0, 0))

    weight_bytes = 2 * (F_PAD * H1 + H1 * H2 + H2 * H3 + H3 * HEAD_PAD)
    bias_bytes = 4 * (H1 + H2 + H3 + HEAD_PAD)
    cost = pl.CostEstimate(
        flops=2 * b_pad * (F_PAD * H1 + H1 * H2 + H2 * H3 + H3 * HEAD_PAD),
        transcendentals=0,
        bytes_accessed=b_pad * F_PAD * 2 + weight_bytes + bias_bytes
        + b_pad * HEAD_PAD * 4,
    )

    out = pl.pallas_call(
        xam_loc_solo_kernel,
        out_shape=jax.ShapeDtypeStruct((b_pad, HEAD_PAD), jnp.float32),
        grid=grid,
        in_specs=[
            pl.BlockSpec((tb, F_PAD), lambda i: (i, 0)),   # x: tiled over batch
            const((F_PAD, H1)), const((1, H1)),
            const((H1, H2)), const((1, H2)),
            const((H2, H3)), const((1, H3)),
            const((H3, HEAD_PAD)), const((1, HEAD_PAD)),
        ],
        out_specs=pl.BlockSpec((tb, HEAD_PAD), lambda i: (i, 0)),
        compiler_params=pltpu.CompilerParams(
            # batch axis is embarrassingly parallel -> 2x on v7x megacore,
            # no effect (free) on v5e/v6e.
            dimension_semantics=("parallel",),
            # explicit budget; safe on v7x's 64 MiB physical VMEM.
            vmem_limit_bytes=32 * 1024 * 1024,
        ),
        cost_estimate=cost,
    )(
        xp,
        prepared["w1"], prepared["b1"],
        prepared["w2"], prepared["b2"],
        prepared["w3"], prepared["b3"],
        prepared["wh"], prepared["bh"],
    )

    value = out[:B, :1]
    policy = out[:B, 1:HEAD]
    return value, policy


def init_params(key):
    """Deterministic init mirroring nn.Linear's U(-1/sqrt(fan_in), 1/sqrt(fan_in))."""
    dims = [
        ("1", STATE_SIZE, H1),
        ("2", H1, H2),
        ("3", H2, H3),
        ("v", H3, 1),
        ("p", H3, ACTION_SIZE),
    ]
    params = {}
    for name, fan_in, fan_out in dims:
        key, kw, kb = jax.random.split(key, 3)
        bound = 1.0 / jnp.sqrt(jnp.float32(fan_in))
        params[f"w{name}"] = jax.random.uniform(
            kw, (fan_in, fan_out), jnp.float32, -bound, bound
        )
        params[f"b{name}"] = jax.random.uniform(
            kb, (1, fan_out), jnp.float32, -bound, bound
        )
    return params


def reference_forward_f32(x, params):
    """Pure-JAX f32 reference matching the PyTorch module exactly."""
    h = jax.nn.relu(x @ params["w1"] + params["b1"])
    h = jax.nn.relu(h @ params["w2"] + params["b2"])
    h = jax.nn.relu(h @ params["w3"] + params["b3"])
    return h @ params["wv"] + params["bv"], h @ params["wp"] + params["bp"]


def reference_forward_bf16(x, params):
    """Pure-JAX reference with the same bf16-input / f32-accumulate scheme."""
    def lin(a, w, b):
        return jnp.dot(a.astype(jnp.bfloat16), w.astype(jnp.bfloat16),
                       preferred_element_type=jnp.float32) + b
    h = jax.nn.relu(lin(x, params["w1"], params["b1"]))
    h = jax.nn.relu(lin(h, params["w2"], params["b2"]))
    h = jax.nn.relu(lin(h, params["w3"], params["b3"]))
    return lin(h, params["wv"], params["bv"]), lin(h, params["wp"], params["bp"])


if __name__ == "__main__":
    key = jax.random.PRNGKey(0)
    key, kx = jax.random.split(key)

    B = 8
    x = jax.random.normal(kx, (B, STATE_SIZE), jnp.float32)
    params = init_params(key)
    prepared = prepare_params(params)

    value, policy = xam_loc_solo_forward(x, prepared)
    jax.block_until_ready((value, policy))

    assert value.shape == (B, 1) and policy.shape == (B, ACTION_SIZE)

    # Tight check vs a reference using the same bf16-in / f32-accumulate math.
    bf_value, bf_policy = reference_forward_bf16(x, params)
    assert jnp.allclose(value, bf_value, atol=1e-2, rtol=1e-2)
    assert jnp.allclose(policy, bf_policy, atol=1e-2, rtol=1e-2)

    # Looser check vs the exact f32 PyTorch-equivalent reference.
    f32_value, f32_policy = reference_forward_f32(x, params)
    assert jnp.allclose(value, f32_value, atol=1e-1, rtol=1e-1)
    assert jnp.allclose(policy, f32_policy, atol=1e-1, rtol=1e-1)

    print("KERNEL_OK")
</pallas_src>

<mosaic_0001>
module attributes {stable_mosaic.version = 11 : i64} {
  func.func @xam_loc_solo_kernel(%arg0: i32, %arg1: memref<8x128xbf16, #tpu.memory_space<vmem>>, %arg2: memref<128x512xbf16, #tpu.memory_space<vmem>>, %arg3: memref<1x512xf32, #tpu.memory_space<vmem>>, %arg4: memref<512x256xbf16, #tpu.memory_space<vmem>>, %arg5: memref<1x256xf32, #tpu.memory_space<vmem>>, %arg6: memref<256x128xbf16, #tpu.memory_space<vmem>>, %arg7: memref<1x128xf32, #tpu.memory_space<vmem>>, %arg8: memref<128x128xbf16, #tpu.memory_space<vmem>>, %arg9: memref<1x128xf32, #tpu.memory_space<vmem>>, %arg10: memref<8x128xf32, #tpu.memory_space<vmem>>) attributes {dimension_semantics = [#tpu.dimension_semantics<parallel>], iteration_bounds = array<i64: 1>, scalar_prefetch = 0 : i64, scratch_operands = 0 : i64, tpu.core_type = #tpu.core_type<tc>, window_params = [{transform_indices = @transform_0, window_bounds = array<i64: 8, 128>}, {pipeline_mode = #tpu.pipeline_mode<synchronous>, transform_indices = @transform_1, window_bounds = array<i64: 128, 512>}, {pipeline_mode = #tpu.pipeline_mode<synchronous>, transform_indices = @transform_2, window_bounds = array<i64: 1, 512>}, {pipeline_mode = #tpu.pipeline_mode<synchronous>, transform_indices = @transform_3, window_bounds = array<i64: 512, 256>}, {pipeline_mode = #tpu.pipeline_mode<synchronous>, transform_indices = @transform_4, window_bounds = array<i64: 1, 256>}, {pipeline_mode = #tpu.pipeline_mode<synchronous>, transform_indices = @transform_5, window_bounds = array<i64: 256, 128>}, {pipeline_mode = #tpu.pipeline_mode<synchronous>, transform_indices = @transform_6, window_bounds = array<i64: 1, 128>}, {pipeline_mode = #tpu.pipeline_mode<synchronous>, transform_indices = @transform_7, window_bounds = array<i64: 128, 128>}, {pipeline_mode = #tpu.pipeline_mode<synchronous>, transform_indices = @transform_8, window_bounds = array<i64: 1, 128>}, {transform_indices = @transform_9, window_bounds = array<i64: 8, 128>}]} {
    %c0 = arith.constant 0 : index
    %c0_0 = arith.constant 0 : index
    %0 = vector.load %arg1[%c0, %c0_0] : memref<8x128xbf16, #tpu.memory_space<vmem>>, vector<8x128xbf16>
    %c0_1 = arith.constant 0 : index
    %c0_2 = arith.constant 0 : index
    %1 = vector.load %arg2[%c0_1, %c0_2] : memref<128x512xbf16, #tpu.memory_space<vmem>>, vector<128x512xbf16>
    %cst = arith.constant dense<0.000000e+00> : vector<8x512xf32>
    %2 = tpu.matmul %0, %1, %cst {dimension_numbers = #tpu.dot_dimension_numbers<[1], [0], [0], [1], [0, 0, 1, 1], [], []>} : vector<8x128xbf16>, vector<128x512xbf16>, vector<8x512xf32> -> vector<8x512xf32>
    %c0_3 = arith.constant 0 : index
    %c0_4 = arith.constant 0 : index
    %3 = vector.load %arg3[%c0_3, %c0_4] : memref<1x512xf32, #tpu.memory_space<vmem>>, vector<1x512xf32>
    %4 = vector.broadcast %3 : vector<1x512xf32> to vector<8x512xf32>
    %5 = arith.addf %2, %4 : vector<8x512xf32>
    %cst_5 = arith.constant 0.000000e+00 : f32
    %6 = vector.broadcast %cst_5 : f32 to vector<8x512xf32>
    %7 = arith.maximumf %5, %6 : vector<8x512xf32>
    %8 = arith.truncf %7 : vector<8x512xf32> to vector<8x512xbf16>
    %c0_6 = arith.constant 0 : index
    %c0_7 = arith.constant 0 : index
    %9 = vector.load %arg4[%c0_6, %c0_7] : memref<512x256xbf16, #tpu.memory_space<vmem>>, vector<512x256xbf16>
    %cst_8 = arith.constant dense<0.000000e+00> : vector<8x256xf32>
    %10 = tpu.matmul %8, %9, %cst_8 {dimension_numbers = #tpu.dot_dimension_numbers<[1], [0], [0], [1], [0, 0, 1, 1], [], []>} : vector<8x512xbf16>, vector<512x256xbf16>, vector<8x256xf32> -> vector<8x256xf32>
    %c0_9 = arith.constant 0 : index
    %c0_10 = arith.constant 0 : index
    %11 = vector.load %arg5[%c0_9, %c0_10] : memref<1x256xf32, #tpu.memory_space<vmem>>, vector<1x256xf32>
    %12 = vector.broadcast %11 : vector<1x256xf32> to vector<8x256xf32>
    %13 = arith.addf %10, %12 : vector<8x256xf32>
    %cst_11 = arith.constant 0.000000e+00 : f32
    %14 = vector.broadcast %cst_11 : f32 to vector<8x256xf32>
    %15 = arith.maximumf %13, %14 : vector<8x256xf32>
    %16 = arith.truncf %15 : vector<8x256xf32> to vector<8x256xbf16>
    %c0_12 = arith.constant 0 : index
    %c0_13 = arith.constant 0 : index
    %17 = vector.load %arg6[%c0_12, %c0_13] : memref<256x128xbf16, #tpu.memory_space<vmem>>, vector<256x128xbf16>
    %cst_14 = arith.constant dense<0.000000e+00> : vector<8x128xf32>
    %18 = tpu.matmul %16, %17, %cst_14 {dimension_numbers = #tpu.dot_dimension_numbers<[1], [0], [0], [1], [0, 0, 1, 1], [], []>} : vector<8x256xbf16>, vector<256x128xbf16>, vector<8x128xf32> -> vector<8x128xf32>
    %c0_15 = arith.constant 0 : index
    %c0_16 = arith.constant 0 : index
    %19 = vector.load %arg7[%c0_15, %c0_16] : memref<1x128xf32, #tpu.memory_space<vmem>>, vector<1x128xf32>
    %20 = vector.broadcast %19 : vector<1x128xf32> to vector<8x128xf32>
    %21 = arith.addf %18, %20 : vector<8x128xf32>
    %cst_17 = arith.constant 0.000000e+00 : f32
    %22 = vector.broadcast %cst_17 : f32 to vector<8x128xf32>
    %23 = arith.maximumf %21, %22 : vector<8x128xf32>
    %24 = arith.truncf %23 : vector<8x128xf32> to vector<8x128xbf16>
    %c0_18 = arith.constant 0 : index
    %c0_19 = arith.constant 0 : index
    %25 = vector.load %arg8[%c0_18, %c0_19] : memref<128x128xbf16, #tpu.memory_space<vmem>>, vector<128x128xbf16>
    %cst_20 = arith.constant dense<0.000000e+00> : vector<8x128xf32>
    %26 = tpu.matmul %24, %25, %cst_20 {dimension_numbers = #tpu.dot_dimension_numbers<[1], [0], [0], [1], [0, 0, 1, 1], [], []>} : vector<8x128xbf16>, vector<128x128xbf16>, vector<8x128xf32> -> vector<8x128xf32>
    %c0_21 = arith.constant 0 : index
    %c0_22 = arith.constant 0 : index
    %27 = vector.load %arg9[%c0_21, %c0_22] : memref<1x128xf32, #tpu.memory_space<vmem>>, vector<1x128xf32>
    %28 = vector.broadcast %27 : vector<1x128xf32> to vector<8x128xf32>
    %29 = arith.addf %26, %28 : vector<8x128xf32>
    %c0_23 = arith.constant 0 : index
    %c0_24 = arith.constant 0 : index
    %30 = vector.load %arg10[%c0_23, %c0_24] : memref<8x128xf32, #tpu.memory_space<vmem>>, vector<8x128xf32>
    tpu.vector_store %arg10[%c0_23, %c0_24], %29 {strides = array<i32>} : memref<8x128xf32, #tpu.memory_space<vmem>>, vector<8x128xf32>,
    return
  }
  func.func @transform_0(%arg0: i32) -> (i32, i32) {
    %c0_i32 = arith.constant 0 : i32
    %c0_i32_0 = arith.constant 0 : i32
    return %arg0, %c0_i32 : i32, i32
  }
  func.func @transform_1(%arg0: i32) -> (i32, i32) {
    %c0_i32 = arith.constant 0 : i32
    %c0_i32_0 = arith.constant 0 : i32
    %c0_i32_1 = arith.constant 0 : i32
    return %c0_i32, %c0_i32_0 : i32, i32
  }
  func.func @transform_2(%arg0: i32) -> (i32, i32) {
    %c0_i32 = arith.constant 0 : i32
    %c0_i32_0 = arith.constant 0 : i32
    %c0_i32_1 = arith.constant 0 : i32
    return %c0_i32, %c0_i32_0 : i32, i32
  }
  func.func @transform_3(%arg0: i32) -> (i32, i32) {
    %c0_i32 = arith.constant 0 : i32
    %c0_i32_0 = arith.constant 0 : i32
    %c0_i32_1 = arith.constant 0 : i32
    return %c0_i32, %c0_i32_0 : i32, i32
  }
  func.func @transform_4(%arg0: i32) -> (i32, i32) {
    %c0_i32 = arith.constant 0 : i32
    %c0_i32_0 = arith.constant 0 : i32
    %c0_i32_1 = arith.constant 0 : i32
    return %c0_i32, %c0_i32_0 : i32, i32
  }
  func.func @transform_5(%arg0: i32) -> (i32, i32) {
    %c0_i32 = arith.constant 0 : i32
    %c0_i32_0 = arith.constant 0 : i32
    %c0_i32_1 = arith.constant 0 : i32
    return %c0_i32, %c0_i32_0 : i32, i32
  }
  func.func @transform_6(%arg0: i32) -> (i32, i32) {
    %c0_i32 = arith.constant 0 : i32
    %c0_i32_0 = arith.constant 0 : i32
    %c0_i32_1 = arith.constant 0 : i32
    return %c0_i32, %c0_i32_0 : i32, i32
  }
  func.func @transform_7(%arg0: i32) -> (i32, i32) {
    %c0_i32 = arith.constant 0 : i32
    %c0_i32_0 = arith.constant 0 : i32
    %c0_i32_1 = arith.constant 0 : i32
    return %c0_i32, %c0_i32_0 : i32, i32
  }
  func.func @transform_8(%arg0: i32) -> (i32, i32) {
    %c0_i32 = arith.constant 0 : i32
    %c0_i32_0 = arith.constant 0 : i32
    %c0_i32_1 = arith.constant 0 : i32
    return %c0_i32, %c0_i32_0 : i32, i32
  }
  func.func @transform_9(%arg0: i32) -> (i32, i32) {
    %c0_i32 = arith.constant 0 : i32
    %c0_i32_0 = arith.constant 0 : i32
    return %arg0, %c0_i32 : i32, i32
  }
}

</mosaic_0001>

<llo_original>
// kernel: xam_loc_solo_forward.1
$region0: #{xam_loc_solo_forward.1}
  #allocation0 [shape = 'u32[]', space=smem, size = 0x4, offset = 0x4, fixed_abs, tag = 'smem constant byte address 0x4 - core index']
  #allocation1 [shape = 'u32[72,128]{1,0:T(1,128)}', space=vmem, size = 0x9000, scoped, tag = 'internal scratch']
  %s0 = inlined_call_operand.vmem [shape: bf16[8,128], index: 0, kind: input, shape index: {}]
  %s1 = inlined_call_operand.hbm [shape: bf16[128,512], index: 1, kind: input, shape index: {}]
  %s2 = inlined_call_operand.vmem [shape: f32[1,512], index: 2, kind: input, shape index: {}]
  %s3 = inlined_call_operand.hbm [shape: bf16[512,256], index: 3, kind: input, shape index: {}]
  %s4 = inlined_call_operand.vmem [shape: f32[1,256], index: 4, kind: input, shape index: {}]
  %s5 = inlined_call_operand.hbm [shape: bf16[256,128], index: 5, kind: input, shape index: {}]
  %s6 = inlined_call_operand.vmem [shape: f32[1,128], index: 6, kind: input, shape index: {}]
  %s7 = inlined_call_operand.hbm [shape: bf16[128,128], index: 7, kind: input, shape index: {}]
  %s8 = inlined_call_operand.vmem [shape: f32[1,128], index: 8, kind: input, shape index: {}]
  %s9 = inlined_call_operand.vmem [shape: f32[8,128], index: 9, kind: output, shape index: {}]
  %s10 = sld [smem:[#allocation0]]
  $region62: #{xam_loc_solo_forward.1} parent=0
    _
  %s12 = ssub.s32 1, %s10
  %s13 = scalar_select 0, %s12, %s10
  $region1: #{xam_loc_solo_forward.1} parent=0
    #allocation2 [shape = 'u8[131072]{0}', space=vmem, size = 0x20000, scoped, tag = 'input window, operand 1, single buffered']
    #allocation3 [shape = 's32[1]{0}', space=sflag, size = 0x4, scoped, tag = 'scoped memory for xam_loc_solo_forward.1']
    #allocation4 [shape = 'u8[262144]{0}', space=vmem, size = 0x40000, scoped, tag = 'input window, operand 3, single buffered']
    #allocation5 [shape = 's32[1]{0}', space=sflag, size = 0x4, scoped, tag = 'scoped memory for xam_loc_solo_forward.1']
    #allocation6 [shape = 'u8[65536]{0}', space=vmem, size = 0x10000, scoped, tag = 'input window, operand 5, single buffered']
    #allocation7 [shape = 'u8[32768]{0}', space=vmem, size = 0x8000, scoped, tag = 'input window, operand 7, single buffered']
    #allocation8 [shape = 's32[1]{0}', space=sflag, size = 0x4, scoped, tag = 'scoped memory for xam_loc_solo_forward.1']
    %14 = vsyncpa [#allocation3], 0
    %15 = vsyncpa [#allocation5], 0
    %16 = vsyncpa [#allocation8], 0
    // Predicated region
    $region2: #{xam_loc_solo_forward.1} parent=1 // pred_check
      _
    $region3: #{xam_loc_solo_forward.1} parent=1 // pred_check_branch
      %18 = sbr.rel (0) target = $region5
    $region4: #{xam_loc_solo_forward.1} parent=1 // pred_region
      _
    $region5: #{xam_loc_solo_forward.1} parent=1 // pred_fallthru
      _
    // Predicated region
    $region6: #{xam_loc_solo_forward.1} parent=1 // pred_check
      _
    $region7: #{xam_loc_solo_forward.1} parent=1 // pred_check_branch
      %20 = sbr.rel (0) target = $region9
    $region8: #{xam_loc_solo_forward.1} parent=1 // pred_region
      %22 = vsyncadd [#allocation3], 0
      %s23 = sshll.u32 %s1, 4
      %s24 = int_to_ptr.hbm [resolvable:$true] %s23
      %s25 = sshll.u32 [#allocation2], 4
      %s26 = int_to_ptr.vmem [resolvable:$true] %s25
      %31 = dma.hbm_to_vmem [thread:$0]  %s24, 4096, %s26, [#allocation3], 256, 256, 16
    $region9: #{xam_loc_solo_forward.1} parent=1 // pred_fallthru
      _
    // Predicated region
    $region10: #{xam_loc_solo_forward.1} parent=1 // pred_check
      _
    $region11: #{xam_loc_solo_forward.1} parent=1 // pred_check_branch
      %33 = sbr.rel (0) target = $region13
    $region12: #{xam_loc_solo_forward.1} parent=1 // pred_region
      _
    $region13: #{xam_loc_solo_forward.1} parent=1 // pred_fallthru
      _
    // Predicated region
    $region14: #{xam_loc_solo_forward.1} parent=1 // pred_check
      _
    $region15: #{xam_loc_solo_forward.1} parent=1 // pred_check_branch
      %35 = sbr.rel (0) target = $region17
    $region16: #{xam_loc_solo_forward.1} parent=1 // pred_region
      %37 = vsyncadd [#allocation5], 0
      %s38 = sshll.u32 %s3, 4
      %s39 = int_to_ptr.hbm [resolvable:$true] %s38
      %s40 = sshll.u32 [#allocation4], 4
      %s41 = int_to_ptr.vmem [resolvable:$true] %s40
      %46 = dma.hbm_to_vmem [thread:$0]  %s39, 8192, %s41, [#allocation5], 128, 128, 8
    $region17: #{xam_loc_solo_forward.1} parent=1 // pred_fallthru
      _
    // Predicated region
    $region18: #{xam_loc_solo_forward.1} parent=1 // pred_check
      _
    $region19: #{xam_loc_solo_forward.1} parent=1 // pred_check_branch
      %48 = sbr.rel (0) target = $region21
    $region20: #{xam_loc_solo_forward.1} parent=1 // pred_region
      _
    $region21: #{xam_loc_solo_forward.1} parent=1 // pred_fallthru
      _
    // Predicated region
    $region22: #{xam_loc_solo_forward.1} parent=1 // pred_check
      _
    $region23: #{xam_loc_solo_forward.1} parent=1 // pred_check_branch
      %50 = sbr.rel (0) target = $region25
    $region24: #{xam_loc_solo_forward.1} parent=1 // pred_region
      %52 = vsyncadd [#allocation5], 0
      %s53 = sshll.u32 %s5, 4
      %s54 = int_to_ptr.hbm [resolvable:$true] %s53
      %s55 = sshll.u32 [#allocation6], 4
      %s56 = int_to_ptr.vmem [resolvable:$true] %s55
      %61 = dma.hbm_to_vmem [thread:$0]  %s54, 2048, %s56, [#allocation5], 64, 64, 4
    $region25: #{xam_loc_solo_forward.1} parent=1 // pred_fallthru
      _
    // Predicated region
    $region26: #{xam_loc_solo_forward.1} parent=1 // pred_check
      _
    $region27: #{xam_loc_solo_forward.1} parent=1 // pred_check_branch
      %63 = sbr.rel (0) target = $region29
    $region28: #{xam_loc_solo_forward.1} parent=1 // pred_region
      _
    $region29: #{xam_loc_solo_forward.1} parent=1 // pred_fallthru
      _
    // Predicated region
    $region30: #{xam_loc_solo_forward.1} parent=1 // pred_check
      _
    $region31: #{xam_loc_solo_forward.1} parent=1 // pred_check_branch
      %65 = sbr.rel (0) target = $region33
    $region32: #{xam_loc_solo_forward.1} parent=1 // pred_region
      %67 = vsyncadd [#allocation8], 0
      %s68 = sshll.u32 %s7, 4
      %s69 = int_to_ptr.hbm [resolvable:$true] %s68
      %s70 = sshll.u32 [#allocation7], 4
      %s71 = int_to_ptr.vmem [resolvable:$true] %s70
      %76 = dma.hbm_to_vmem [thread:$0]  %s69, 1024, %s71, [#allocation8], 64, 64, 4
    $region33: #{xam_loc_solo_forward.1} parent=1 // pred_fallthru
      _
    // Predicated region
    $region34: #{xam_loc_solo_forward.1} parent=1 // pred_check
      _
    $region35: #{xam_loc_solo_forward.1} parent=1 // pred_check_branch
      %78 = sbr.rel (0) target = $region37
    $region36: #{xam_loc_solo_forward.1} parent=1 // pred_region
      _
    $region37: #{xam_loc_solo_forward.1} parent=1 // pred_fallthru
      _
    // Predicated region
    $region38: #{xam_loc_solo_forward.1} parent=1 // pred_check
      _
    $region39: #{xam_loc_solo_forward.1} parent=1 // pred_check_branch
      %80 = sbr.rel (0) target = $region41
    $region40: #{xam_loc_solo_forward.1} parent=1 // pred_region
      %82 = dma.done [#allocation3], 4096
    $region41: #{xam_loc_solo_forward.1} parent=1 // pred_fallthru
      _
    // Predicated region
    $region42: #{xam_loc_solo_forward.1} parent=1 // pred_check
      _
    $region43: #{xam_loc_solo_forward.1} parent=1 // pred_check_branch
      %84 = sbr.rel (0) target = $region45
    $region44: #{xam_loc_solo_forward.1} parent=1 // pred_region
      %86 = dma.done [#allocation5], 8192
    $region45: #{xam_loc_solo_forward.1} parent=1 // pred_fallthru
      _
    // Predicated region
    $region46: #{xam_loc_solo_forward.1} parent=1 // pred_check
      _
    $region47: #{xam_loc_solo_forward.1} parent=1 // pred_check_branch
      %88 = sbr.rel (0) target = $region49
    $region48: #{xam_loc_solo_forward.1} parent=1 // pred_region
      %90 = dma.done [#allocation5], 2048
    $region49: #{xam_loc_solo_forward.1} parent=1 // pred_fallthru
      _
    // Predicated region
    $region50: #{xam_loc_solo_forward.1} parent=1 // pred_check
      _
    $region51: #{xam_loc_solo_forward.1} parent=1 // pred_check_branch
      %92 = sbr.rel (0) target = $region53
    $region52: #{xam_loc_solo_forward.1} parent=1 // pred_region
      %94 = dma.done [#allocation8], 1024
    $region53: #{xam_loc_solo_forward.1} parent=1 // pred_fallthru
      _
    %v95 = vld [vmem:[%s0] sm:$0xf]
    %v96 = vld [vmem:[#allocation2] sm:$0xff]
    %v97 = vld [vmem:[#allocation2 + $0x8] sm:$0xff]
    %v98 = vld [vmem:[#allocation2 + $0x10] sm:$0xff]
    %v99 = vld [vmem:[#allocation2 + $0x18] sm:$0xff]
    %v100 = vld [vmem:[#allocation2 + $0x20] sm:$0xff]
    %v101 = vld [vmem:[#allocation2 + $0x28] sm:$0xff]
    %v102 = vld [vmem:[#allocation2 + $0x30] sm:$0xff]
    %v103 = vld [vmem:[#allocation2 + $0x38] sm:$0xff]
    %v104 = vld [vmem:[#allocation2 + $0x40] sm:$0xff]
    %v105 = vld [vmem:[#allocation2 + $0x48] sm:$0xff]
    %v106 = vld [vmem:[#allocation2 + $0x50] sm:$0xff]
    %v107 = vld [vmem:[#allocation2 + $0x58] sm:$0xff]
    %v108 = vld [vmem:[#allocation2 + $0x60] sm:$0xff]
    %v109 = vld [vmem:[#allocation2 + $0x68] sm:$0xff]
    %v110 = vld [vmem:[#allocation2 + $0x70] sm:$0xff]
    %v111 = vld [vmem:[#allocation2 + $0x78] sm:$0xff]
    %v112 = vld [vmem:[#allocation2 + $0x80] sm:$0xff]
    %v113 = vld [vmem:[#allocation2 + $0x88] sm:$0xff]
    %v114 = vld [vmem:[#allocation2 + $0x90] sm:$0xff]
    %v115 = vld [vmem:[#allocation2 + $0x98] sm:$0xff]
    %v116 = vld [vmem:[#allocation2 + $0xa0] sm:$0xff]
    %v117 = vld [vmem:[#allocation2 + $0xa8] sm:$0xff]
    %v118 = vld [vmem:[#allocation2 + $0xb0] sm:$0xff]
    %v119 = vld [vmem:[#allocation2 + $0xb8] sm:$0xff]
    %v120 = vld [vmem:[#allocation2 + $0xc0] sm:$0xff]
    %v121 = vld [vmem:[#allocation2 + $0xc8] sm:$0xff]
    %v122 = vld [vmem:[#allocation2 + $0xd0] sm:$0xff]
    %v123 = vld [vmem:[#allocation2 + $0xd8] sm:$0xff]
    %v124 = vld [vmem:[#allocation2 + $0xe0] sm:$0xff]
    %v125 = vld [vmem:[#allocation2 + $0xe8] sm:$0xff]
    %v126 = vld [vmem:[#allocation2 + $0xf0] sm:$0xff]
    %v127 = vld [vmem:[#allocation2 + $0xf8] sm:$0xff]
    %v128 = vld [vmem:[%s2] sm:$0xf]
    %v130 = vperm.slane %v128, 0
    %v131 = vperm.slane %v128, 1
    %v132 = vperm.slane %v128, 2
    %v133 = vperm.slane %v128, 3
    %v170 = vunpack.c.l.b16 %v96
    %v171 = vunpack.c.h.b16 %v96
    %v172 = vunpack.c.l.b16 %v97
    %v173 = vunpack.c.h.b16 %v97
    %v174 = vunpack.c.l.b16 %v98
    %v175 = vunpack.c.h.b16 %v98
    %v176 = vunpack.c.l.b16 %v99
    %v177 = vunpack.c.h.b16 %v99
    %v178 = vunpack.c.l.b16 %v100
    %v179 = vunpack.c.h.b16 %v100
    %v180 = vunpack.c.l.b16 %v101
    %v181 = vunpack.c.h.b16 %v101
    %v182 = vunpack.c.l.b16 %v102
    %v183 = vunpack.c.h.b16 %v102
    %v184 = vunpack.c.l.b16 %v103
    %v185 = vunpack.c.h.b16 %v103
    %v186 = vunpack.c.l.b16 %v104
    %v187 = vunpack.c.h.b16 %v104
    %v188 = vunpack.c.l.b16 %v105
    %v189 = vunpack.c.h.b16 %v105
    %v190 = vunpack.c.l.b16 %v106
    %v191 = vunpack.c.h.b16 %v106
    %v192 = vunpack.c.l.b16 %v107
    %v193 = vunpack.c.h.b16 %v107
    %v194 = vunpack.c.l.b16 %v108
    %v195 = vunpack.c.h.b16 %v108
    %v196 = vunpack.c.l.b16 %v109
    %v197 = vunpack.c.h.b16 %v109
    %v198 = vunpack.c.l.b16 %v110
    %v199 = vunpack.c.h.b16 %v110
    %v200 = vunpack.c.l.b16 %v111
    %v201 = vunpack.c.h.b16 %v111
    %v202 = vunpack.c.l.b16 %v112
    %v203 = vunpack.c.h.b16 %v112
    %v204 = vunpack.c.l.b16 %v113
    %v205 = vunpack.c.h.b16 %v113
    %v206 = vunpack.c.l.b16 %v114
    %v207 = vunpack.c.h.b16 %v114
    %v208 = vunpack.c.l.b16 %v115
    %v209 = vunpack.c.h.b16 %v115
    %v210 = vunpack.c.l.b16 %v116
    %v211 = vunpack.c.h.b16 %v116
    %v212 = vunpack.c.l.b16 %v117
    %v213 = vunpack.c.h.b16 %v117
    %v214 = vunpack.c.l.b16 %v118
    %v215 = vunpack.c.h.b16 %v118
    %v216 = vunpack.c.l.b16 %v119
    %v217 = vunpack.c.h.b16 %v119
    %v218 = vunpack.c.l.b16 %v120
    %v219 = vunpack.c.h.b16 %v120
    %v220 = vunpack.c.l.b16 %v121
    %v221 = vunpack.c.h.b16 %v121
    %v222 = vunpack.c.l.b16 %v122
    %v223 = vunpack.c.h.b16 %v122
    %v224 = vunpack.c.l.b16 %v123
    %v225 = vunpack.c.h.b16 %v123
    %v226 = vunpack.c.l.b16 %v124
    %v227 = vunpack.c.h.b16 %v124
    %v228 = vunpack.c.l.b16 %v125
    %v229 = vunpack.c.h.b16 %v125
    %v230 = vunpack.c.l.b16 %v126
    %v231 = vunpack.c.h.b16 %v126
    %v232 = vunpack.c.l.b16 %v127
    %v233 = vunpack.c.h.b16 %v127
    %v234 = vpack.c.b16 %v174, %v170
    %v235 = vpack.c.b16 %v175, %v171
    %v236 = vpack.c.b16 %v176, %v172
    %v237 = vpack.c.b16 %v177, %v173
    %v238 = vpack.c.b16 %v182, %v178
    %v239 = vpack.c.b16 %v183, %v179
    %v240 = vpack.c.b16 %v184, %v180
    %v241 = vpack.c.b16 %v185, %v181
    %v242 = vpack.c.b16 %v190, %v186
    %v243 = vpack.c.b16 %v191, %v187
    %v244 = vpack.c.b16 %v192, %v188
    %v245 = vpack.c.b16 %v193, %v189
    %v246 = vpack.c.b16 %v198, %v194
    %v247 = vpack.c.b16 %v199, %v195
    %v248 = vpack.c.b16 %v200, %v196
    %v249 = vpack.c.b16 %v201, %v197
    %v250 = vpack.c.b16 %v206, %v202
    %v251 = vpack.c.b16 %v207, %v203
    %v252 = vpack.c.b16 %v208, %v204
    %v253 = vpack.c.b16 %v209, %v205
    %v254 = vpack.c.b16 %v214, %v210
    %v255 = vpack.c.b16 %v215, %v211
    %v256 = vpack.c.b16 %v216, %v212
    %v257 = vpack.c.b16 %v217, %v213
    %v258 = vpack.c.b16 %v222, %v218
    %v259 = vpack.c.b16 %v223, %v219
    %v260 = vpack.c.b16 %v224, %v220
    %v261 = vpack.c.b16 %v225, %v221
    %v262 = vpack.c.b16 %v230, %v226
    %v263 = vpack.c.b16 %v231, %v227
    %v264 = vpack.c.b16 %v232, %v228
    %v265 = vpack.c.b16 %v233, %v229
    %298 = vmatpush.bf16.msra.mxu0 %v262
    %299 = vmatpush.bf16.msra.mxu0 %v258
    %300 = vmatpush.bf16.msra.mxu0 %v254
    %301 = vmatpush.bf16.msra.mxu0 %v250
    %302 = vmatpush.bf16.msra.mxu0 %v246
    %303 = vmatpush.bf16.msra.mxu0 %v242
    %304 = vmatpush.bf16.msra.mxu0 %v238
    %305 = vmatpush.bf16.msra.mxu0 %v234
    %306 = vmatmul.bf16.gmra.mxu0 %v95
    %v307 = vpop.f32.mrf.mxu0
    %v308 = vadd.f32 %v130, %v307
    %v309 = vpop.f32.mrf.mxu0
    %310 = vdwg.mxu0
    %311 = vmatpush.bf16.msra.mxu0 %v263
    %312 = vmatpush.bf16.msra.mxu0 %v259
    %313 = vmatpush.bf16.msra.mxu0 %v255
    %314 = vmatpush.bf16.msra.mxu0 %v251
    %315 = vmatpush.bf16.msra.mxu0 %v247
    %316 = vmatpush.bf16.msra.mxu0 %v243
    %317 = vmatpush.bf16.msra.mxu0 %v239
    %318 = vmatpush.bf16.msra.mxu0 %v235
    %319 = vmatmul.bf16.gmra.mxu0 %v95
    %v320 = vpop.f32.mrf.mxu0
    %v321 = vadd.f32 %v131, %v320
    %v322 = vpop.f32.mrf.mxu0
    %323 = vdwg.mxu0
    %324 = vmatpush.bf16.msra.mxu0 %v264
    %325 = vmatpush.bf16.msra.mxu0 %v260
    %326 = vmatpush.bf16.msra.mxu0 %v256
    %327 = vmatpush.bf16.msra.mxu0 %v252
    %328 = vmatpush.bf16.msra.mxu0 %v248
    %329 = vmatpush.bf16.msra.mxu0 %v244
    %330 = vmatpush.bf16.msra.mxu0 %v240
    %331 = vmatpush.bf16.msra.mxu0 %v236
    %332 = vmatmul.bf16.gmra.mxu0 %v95
    %v333 = vpop.f32.mrf.mxu0
    %v334 = vadd.f32 %v132, %v333
    %v335 = vpop.f32.mrf.mxu0
    %336 = vdwg.mxu0
    %337 = vmatpush.bf16.msra.mxu0 %v265
    %338 = vmatpush.bf16.msra.mxu0 %v261
    %339 = vmatpush.bf16.msra.mxu0 %v257
    %340 = vmatpush.bf16.msra.mxu0 %v253
    %341 = vmatpush.bf16.msra.mxu0 %v249
    %342 = vmatpush.bf16.msra.mxu0 %v245
    %343 = vmatpush.bf16.msra.mxu0 %v241
    %344 = vmatpush.bf16.msra.mxu0 %v237
    %345 = vmatmul.bf16.gmra.mxu0 %v95
    %v346 = vpop.f32.mrf.mxu0
    %v347 = vadd.f32 %v133, %v346
    %v348 = vpop.f32.mrf.mxu0
    %349 = vdwg.mxu0
    %v350 = vmax.f32 %v308, 0.0
    %v351 = vmax.f32 %v321, 0.0
    %v352 = vmax.f32 %v334, 0.0
    %v353 = vmax.f32 %v347, 0.0
    %v354 = vpack.c.bf16 %v350, %v350
    %v355 = vpack.c.bf16 %v351, %v351
    %v356 = vpack.c.bf16 %v352, %v352
    %v357 = vpack.c.bf16 %v353, %v353
    %v358 = vld [vmem:[#allocation4] sm:$0xff]
    %v359 = vld [vmem:[#allocation4 + $0x8] sm:$0xff]
    %v360 = vld [vmem:[#allocation4 + $0x10] sm:$0xff]
    %v361 = vld [vmem:[#allocation4 + $0x18] sm:$0xff]
    %v362 = vld [vmem:[#allocation4 + $0x20] sm:$0xff]
    %v363 = vld [vmem:[#allocation4 + $0x28] sm:$0xff]
    %v364 = vld [vmem:[#allocation4 + $0x30] sm:$0xff]
    %v365 = vld [vmem:[#allocation4 + $0x38] sm:$0xff]
    %v366 = vld [vmem:[#allocation4 + $0x40] sm:$0xff]
    %v367 = vld [vmem:[#allocation4 + $0x48] sm:$0xff]
    %v368 = vld [vmem:[#allocation4 + $0x50] sm:$0xff]
    %v369 = vld [vmem:[#allocation4 + $0x58] sm:$0xff]
    %v370 = vld [vmem:[#allocation4 + $0x60] sm:$0xff]
    %v371 = vld [vmem:[#allocation4 + $0x68] sm:$0xff]
    %v372 = vld [vmem:[#allocation4 + $0x70] sm:$0xff]
    %v373 = vld [vmem:[#allocation4 + $0x78] sm:$0xff]
    %v374 = vld [vmem:[#allocation4 + $0x80] sm:$0xff]
    %v375 = vld [vmem:[#allocation4 + $0x88] sm:$0xff]
    %v376 = vld [vmem:[#allocation4 + $0x90] sm:$0xff]
    %v377 = vld [vmem:[#allocation4 + $0x98] sm:$0xff]
    %v378 = vld [vmem:[#allocation4 + $0xa0] sm:$0xff]
    %v379 = vld [vmem:[#allocation4 + $0xa8] sm:$0xff]
    %v380 = vld [vmem:[#allocation4 + $0xb0] sm:$0xff]
    %v381 = vld [vmem:[#allocation4 + $0xb8] sm:$0xff]
    %v382 = vld [vmem:[#allocation4 + $0xc0] sm:$0xff]
    %v383 = vld [vmem:[#allocation4 + $0xc8] sm:$0xff]
    %v384 = vld [vmem:[#allocation4 + $0xd0] sm:$0xff]
    %v385 = vld [vmem:[#allocation4 + $0xd8] sm:$0xff]
    %v386 = vld [vmem:[#allocation4 + $0xe0] sm:$0xff]
    %v387 = vld [vmem:[#allocation4 + $0xe8] sm:$0xff]
    %v388 = vld [vmem:[#allocation4 + $0xf0] sm:$0xff]
    %v389 = vld [vmem:[#allocation4 + $0xf8] sm:$0xff]
    %v390 = vld [vmem:[#allocation4 + $0x100] sm:$0xff]
    %v391 = vld [vmem:[#allocation4 + $0x108] sm:$0xff]
    %v392 = vld [vmem:[#allocation4 + $0x110] sm:$0xff]
    %v393 = vld [vmem:[#allocation4 + $0x118] sm:$0xff]
    %v394 = vld [vmem:[#allocation4 + $0x120] sm:$0xff]
    %v395 = vld [vmem:[#allocation4 + $0x128] sm:$0xff]
    %v396 = vld [vmem:[#allocation4 + $0x130] sm:$0xff]
    %v397 = vld [vmem:[#allocation4 + $0x138] sm:$0xff]
    %v398 = vld [vmem:[#allocation4 + $0x140] sm:$0xff]
    %v399 = vld [vmem:[#allocation4 + $0x148] sm:$0xff]
    %v400 = vld [vmem:[#allocation4 + $0x150] sm:$0xff]
    %v401 = vld [vmem:[#allocation4 + $0x158] sm:$0xff]
    %v402 = vld [vmem:[#allocation4 + $0x160] sm:$0xff]
    %v403 = vld [vmem:[#allocation4 + $0x168] sm:$0xff]
    %v404 = vld [vmem:[#allocation4 + $0x170] sm:$0xff]
    %v405 = vld [vmem:[#allocation4 + $0x178] sm:$0xff]
    %v406 = vld [vmem:[#allocation4 + $0x180] sm:$0xff]
    %v407 = vld [vmem:[#allocation4 + $0x188] sm:$0xff]
    %v408 = vld [vmem:[#allocation4 + $0x190] sm:$0xff]
    %v409 = vld [vmem:[#allocation4 + $0x198] sm:$0xff]
    %v410 = vld [vmem:[#allocation4 + $0x1a0] sm:$0xff]
    %v411 = vld [vmem:[#allocation4 + $0x1a8] sm:$0xff]
    %v412 = vld [vmem:[#allocation4 + $0x1b0] sm:$0xff]
    %v413 = vld [vmem:[#allocation4 + $0x1b8] sm:$0xff]
    %v414 = vld [vmem:[#allocation4 + $0x1c0] sm:$0xff]
    %v415 = vld [vmem:[#allocation4 + $0x1c8] sm:$0xff]
    %v416 = vld [vmem:[#allocation4 + $0x1d0] sm:$0xff]
    %v417 = vld [vmem:[#allocation4 + $0x1d8] sm:$0xff]
    %v418 = vld [vmem:[#allocation4 + $0x1e0] sm:$0xff]
    %v419 = vld [vmem:[#allocation4 + $0x1e8] sm:$0xff]
    %v420 = vld [vmem:[#allocation4 + $0x1f0] sm:$0xff]
    %v421 = vld [vmem:[#allocation4 + $0x1f8] sm:$0xff]
    %v422 = vld [vmem:[%s4] sm:$0x3]
    %v424 = vperm.slane %v422, 0
    %v425 = vperm.slane %v422, 1
    %v492 = vunpack.c.l.b16 %v358
    %v493 = vunpack.c.h.b16 %v358
    %v494 = vunpack.c.l.b16 %v359
    %v495 = vunpack.c.h.b16 %v359
    %v496 = vunpack.c.l.b16 %v360
    %v497 = vunpack.c.h.b16 %v360
    %v498 = vunpack.c.l.b16 %v361
    %v499 = vunpack.c.h.b16 %v361
    %v500 = vunpack.c.l.b16 %v362
    %v501 = vunpack.c.h.b16 %v362
    %v502 = vunpack.c.l.b16 %v363
    %v503 = vunpack.c.h.b16 %v363
    %v504 = vunpack.c.l.b16 %v364
    %v505 = vunpack.c.h.b16 %v364
    %v506 = vunpack.c.l.b16 %v365
    %v507 = vunpack.c.h.b16 %v365
    %v508 = vunpack.c.l.b16 %v366
    %v509 = vunpack.c.h.b16 %v366
    %v510 = vunpack.c.l.b16 %v367
    %v511 = vunpack.c.h.b16 %v367
    %v512 = vunpack.c.l.b16 %v368
    %v513 = vunpack.c.h.b16 %v368
    %v514 = vunpack.c.l.b16 %v369
    %v515 = vunpack.c.h.b16 %v369
    %v516 = vunpack.c.l.b16 %v370
    %v517 = vunpack.c.h.b16 %v370
    %v518 = vunpack.c.l.b16 %v371
    %v519 = vunpack.c.h.b16 %v371
    %v520 = vunpack.c.l.b16 %v372
    %v521 = vunpack.c.h.b16 %v372
    %v522 = vunpack.c.l.b16 %v373
    %v523 = vunpack.c.h.b16 %v373
    %v524 = vunpack.c.l.b16 %v374
    %v525 = vunpack.c.h.b16 %v374
    %v526 = vunpack.c.l.b16 %v375
    %v527 = vunpack.c.h.b16 %v375
    %v528 = vunpack.c.l.b16 %v376
    %v529 = vunpack.c.h.b16 %v376
    %v530 = vunpack.c.l.b16 %v377
    %v531 = vunpack.c.h.b16 %v377
    %v532 = vunpack.c.l.b16 %v378
    %v533 = vunpack.c.h.b16 %v378
    %v534 = vunpack.c.l.b16 %v379
    %v535 = vunpack.c.h.b16 %v379
    %v536 = vunpack.c.l.b16 %v380
    %v537 = vunpack.c.h.b16 %v380
    %v538 = vunpack.c.l.b16 %v381
    %v539 = vunpack.c.h.b16 %v381
    %v540 = vunpack.c.l.b16 %v382
    %v541 = vunpack.c.h.b16 %v382
    %v542 = vunpack.c.l.b16 %v383
    %v543 = vunpack.c.h.b16 %v383
    %v544 = vunpack.c.l.b16 %v384
    %v545 = vunpack.c.h.b16 %v384
    %v546 = vunpack.c.l.b16 %v385
    %v547 = vunpack.c.h.b16 %v385
    %v548 = vunpack.c.l.b16 %v386
    %v549 = vunpack.c.h.b16 %v386
    %v550 = vunpack.c.l.b16 %v387
    %v551 = vunpack.c.h.b16 %v387
    %v552 = vunpack.c.l.b16 %v388
    %v553 = vunpack.c.h.b16 %v388
    %v554 = vunpack.c.l.b16 %v389
    %v555 = vunpack.c.h.b16 %v389
    %v556 = vunpack.c.l.b16 %v390
    %v557 = vunpack.c.h.b16 %v390
    %v558 = vunpack.c.l.b16 %v391
    %v559 = vunpack.c.h.b16 %v391
    %v560 = vunpack.c.l.b16 %v392
    %v561 = vunpack.c.h.b16 %v392
    %v562 = vunpack.c.l.b16 %v393
    %v563 = vunpack.c.h.b16 %v393
    %v564 = vunpack.c.l.b16 %v394
    %v565 = vunpack.c.h.b16 %v394
    %v566 = vunpack.c.l.b16 %v395
    %v567 = vunpack.c.h.b16 %v395
    %v568 = vunpack.c.l.b16 %v396
    %v569 = vunpack.c.h.b16 %v396
    %v570 = vunpack.c.l.b16 %v397
    %v571 = vunpack.c.h.b16 %v397
    %v572 = vunpack.c.l.b16 %v398
    %v573 = vunpack.c.h.b16 %v398
    %v574 = vunpack.c.l.b16 %v399
    %v575 = vunpack.c.h.b16 %v399
    %v576 = vunpack.c.l.b16 %v400
    %v577 = vunpack.c.h.b16 %v400
    %v578 = vunpack.c.l.b16 %v401
    %v579 = vunpack.c.h.b16 %v401
    %v580 = vunpack.c.l.b16 %v402
    %v581 = vunpack.c.h.b16 %v402
    %v582 = vunpack.c.l.b16 %v403
    %v583 = vunpack.c.h.b16 %v403
    %v584 = vunpack.c.l.b16 %v404
    %v585 = vunpack.c.h.b16 %v404
    %v586 = vunpack.c.l.b16 %v405
    %v587 = vunpack.c.h.b16 %v405
    %v588 = vunpack.c.l.b16 %v406
    %v589 = vunpack.c.h.b16 %v406
    %v590 = vunpack.c.l.b16 %v407
    %v591 = vunpack.c.h.b16 %v407
    %v592 = vunpack.c.l.b16 %v408
    %v593 = vunpack.c.h.b16 %v408
    %v594 = vunpack.c.l.b16 %v409
    %v595 = vunpack.c.h.b16 %v409
    %v596 = vunpack.c.l.b16 %v410
    %v597 = vunpack.c.h.b16 %v410
    %v598 = vunpack.c.l.b16 %v411
    %v599 = vunpack.c.h.b16 %v411
    %v600 = vunpack.c.l.b16 %v412
    %v601 = vunpack.c.h.b16 %v412
    %v602 = vunpack.c.l.b16 %v413
    %v603 = vunpack.c.h.b16 %v413
    %v604 = vunpack.c.l.b16 %v414
    %v605 = vunpack.c.h.b16 %v414
    %v606 = vunpack.c.l.b16 %v415
    %v607 = vunpack.c.h.b16 %v415
    %v608 = vunpack.c.l.b16 %v416
    %v609 = vunpack.c.h.b16 %v416
    %v610 = vunpack.c.l.b16 %v417
    %v611 = vunpack.c.h.b16 %v417
    %v612 = vunpack.c.l.b16 %v418
    %v613 = vunpack.c.h.b16 %v418
    %v614 = vunpack.c.l.b16 %v419
    %v615 = vunpack.c.h.b16 %v419
    %v616 = vunpack.c.l.b16 %v420
    %v617 = vunpack.c.h.b16 %v420
    %v618 = vunpack.c.l.b16 %v421
    %v619 = vunpack.c.h.b16 %v421
    %v620 = vpack.c.b16 %v494, %v492
    %v621 = vpack.c.b16 %v495, %v493
    %v622 = vpack.c.b16 %v498, %v496
    %v623 = vpack.c.b16 %v499, %v497
    %v624 = vpack.c.b16 %v502, %v500
    %v625 = vpack.c.b16 %v503, %v501
    %v626 = vpack.c.b16 %v506, %v504
    %v627 = vpack.c.b16 %v507, %v505
    %v628 = vpack.c.b16 %v510, %v508
    %v629 = vpack.c.b16 %v511, %v509
    %v630 = vpack.c.b16 %v514, %v512
    %v631 = vpack.c.b16 %v515, %v513
    %v632 = vpack.c.b16 %v518, %v516
    %v633 = vpack.c.b16 %v519, %v517
    %v634 = vpack.c.b16 %v522, %v520
    %v635 = vpack.c.b16 %v523, %v521
    %v636 = vpack.c.b16 %v526, %v524
    %v637 = vpack.c.b16 %v527, %v525
    %v638 = vpack.c.b16 %v530, %v528
    %v639 = vpack.c.b16 %v531, %v529
    %v640 = vpack.c.b16 %v534, %v532
    %v641 = vpack.c.b16 %v535, %v533
    %v642 = vpack.c.b16 %v538, %v536
    %v643 = vpack.c.b16 %v539, %v537
    %v644 = vpack.c.b16 %v542, %v540
    %v645 = vpack.c.b16 %v543, %v541
    %v646 = vpack.c.b16 %v546, %v544
    %v647 = vpack.c.b16 %v547, %v545
    %v648 = vpack.c.b16 %v550, %v548
    %v649 = vpack.c.b16 %v551, %v549
    %v650 = vpack.c.b16 %v554, %v552
    %v651 = vpack.c.b16 %v555, %v553
    %v652 = vpack.c.b16 %v558, %v556
    %v653 = vpack.c.b16 %v559, %v557
    %v654 = vpack.c.b16 %v562, %v560
    %v655 = vpack.c.b16 %v563, %v561
    %v656 = vpack.c.b16 %v566, %v564
    %v657 = vpack.c.b16 %v567, %v565
    %v658 = vpack.c.b16 %v570, %v568
    %v659 = vpack.c.b16 %v571, %v569
    %v660 = vpack.c.b16 %v574, %v572
    %v661 = vpack.c.b16 %v575, %v573
    %v662 = vpack.c.b16 %v578, %v576
    %v663 = vpack.c.b16 %v579, %v577
    %v664 = vpack.c.b16 %v582, %v580
    %v665 = vpack.c.b16 %v583, %v581
    %v666 = vpack.c.b16 %v586, %v584
    %v667 = vpack.c.b16 %v587, %v585
    %v668 = vpack.c.b16 %v590, %v588
    %v669 = vpack.c.b16 %v591, %v589
    %v670 = vpack.c.b16 %v594, %v592
    %v671 = vpack.c.b16 %v595, %v593
    %v672 = vpack.c.b16 %v598, %v596
    %v673 = vpack.c.b16 %v599, %v597
    %v674 = vpack.c.b16 %v602, %v600
    %v675 = vpack.c.b16 %v603, %v601
    %v676 = vpack.c.b16 %v606, %v604
    %v677 = vpack.c.b16 %v607, %v605
    %v678 = vpack.c.b16 %v610, %v608
    %v679 = vpack.c.b16 %v611, %v609
    %v680 = vpack.c.b16 %v614, %v612
    %v681 = vpack.c.b16 %v615, %v613
    %v682 = vpack.c.b16 %v618, %v616
    %v683 = vpack.c.b16 %v619, %v617
    %748 = vmatpush.bf16.msra.mxu0 %v634
    %749 = vmatpush.bf16.msra.mxu0 %v632
    %750 = vmatpush.bf16.msra.mxu0 %v630
    %751 = vmatpush.bf16.msra.mxu0 %v628
    %752 = vmatpush.bf16.msra.mxu0 %v626
    %753 = vmatpush.bf16.msra.mxu0 %v624
    %754 = vmatpush.bf16.msra.mxu0 %v622
    %755 = vmatpush.bf16.msra.mxu0 %v620
    %756 = vmatmul.bf16.gmra.mxu0 %v354
    %v757 = vpop.f32.mrf.mxu0
    %v758 = vadd.f32 %v424, %v757
    %v759 = vpop.f32.mrf.mxu0
    %760 = vdwg.mxu0
    %761 = vmatpush.bf16.msra.mxu0 %v650
    %762 = vmatpush.bf16.msra.mxu0 %v648
    %763 = vmatpush.bf16.msra.mxu0 %v646
    %764 = vmatpush.bf16.msra.mxu0 %v644
    %765 = vmatpush.bf16.msra.mxu0 %v642
    %766 = vmatpush.bf16.msra.mxu0 %v640
    %767 = vmatpush.bf16.msra.mxu0 %v638
    %768 = vmatpush.bf16.msra.mxu0 %v636
    %769 = vmatmul.bf16.gmra.mxu0 %v355
    %v770 = vpop.f32.mrf.mxu0
    %v771 = vadd.f32 %v758, %v770
    %v772 = vpop.f32.mrf.mxu0
    %773 = vdwg.mxu0
    %774 = vmatpush.bf16.msra.mxu0 %v666
    %775 = vmatpush.bf16.msra.mxu0 %v664
    %776 = vmatpush.bf16.msra.mxu0 %v662
    %777 = vmatpush.bf16.msra.mxu0 %v660
    %778 = vmatpush.bf16.msra.mxu0 %v658
    %779 = vmatpush.bf16.msra.mxu0 %v656
    %780 = vmatpush.bf16.msra.mxu0 %v654
    %781 = vmatpush.bf16.msra.mxu0 %v652
    %782 = vmatmul.bf16.gmra.mxu0 %v356
    %v783 = vpop.f32.mrf.mxu0
    %v784 = vadd.f32 %v771, %v783
    %v785 = vpop.f32.mrf.mxu0
    %786 = vdwg.mxu0
    %787 = vmatpush.bf16.msra.mxu0 %v682
    %788 = vmatpush.bf16.msra.mxu0 %v680
    %789 = vmatpush.bf16.msra.mxu0 %v678
    %790 = vmatpush.bf16.msra.mxu0 %v676
    %791 = vmatpush.bf16.msra.mxu0 %v674
    %792 = vmatpush.bf16.msra.mxu0 %v672
    %793 = vmatpush.bf16.msra.mxu0 %v670
    %794 = vmatpush.bf16.msra.mxu0 %v668
    %795 = vmatmul.bf16.gmra.mxu0 %v357
    %v796 = vpop.f32.mrf.mxu0
    %v797 = vadd.f32 %v784, %v796
    %v798 = vpop.f32.mrf.mxu0
    %799 = vdwg.mxu0
    %800 = vmatpush.bf16.msra.mxu0 %v635
    %801 = vmatpush.bf16.msra.mxu0 %v633
    %802 = vmatpush.bf16.msra.mxu0 %v631
    %803 = vmatpush.bf16.msra.mxu0 %v629
    %804 = vmatpush.bf16.msra.mxu0 %v627
    %805 = vmatpush.bf16.msra.mxu0 %v625
    %806 = vmatpush.bf16.msra.mxu0 %v623
    %807 = vmatpush.bf16.msra.mxu0 %v621
    %808 = vmatmul.bf16.gmra.mxu0 %v354
    %v809 = vpop.f32.mrf.mxu0
    %v810 = vadd.f32 %v425, %v809
    %v811 = vpop.f32.mrf.mxu0
    %812 = vdwg.mxu0
    %813 = vmatpush.bf16.msra.mxu0 %v651
    %814 = vmatpush.bf16.msra.mxu0 %v649
    %815 = vmatpush.bf16.msra.mxu0 %v647
    %816 = vmatpush.bf16.msra.mxu0 %v645
    %817 = vmatpush.bf16.msra.mxu0 %v643
    %818 = vmatpush.bf16.msra.mxu0 %v641
    %819 = vmatpush.bf16.msra.mxu0 %v639
    %820 = vmatpush.bf16.msra.mxu0 %v637
    %821 = vmatmul.bf16.gmra.mxu0 %v355
    %v822 = vpop.f32.mrf.mxu0
    %v823 = vadd.f32 %v810, %v822
    %v824 = vpop.f32.mrf.mxu0
    %825 = vdwg.mxu0
    %826 = vmatpush.bf16.msra.mxu0 %v667
    %827 = vmatpush.bf16.msra.mxu0 %v665
    %828 = vmatpush.bf16.msra.mxu0 %v663
    %829 = vmatpush.bf16.msra.mxu0 %v661
    %830 = vmatpush.bf16.msra.mxu0 %v659
    %831 = vmatpush.bf16.msra.mxu0 %v657
    %832 = vmatpush.bf16.msra.mxu0 %v655
    %833 = vmatpush.bf16.msra.mxu0 %v653
    %834 = vmatmul.bf16.gmra.mxu0 %v356
    %v835 = vpop.f32.mrf.mxu0
    %v836 = vadd.f32 %v823, %v835
    %v837 = vpop.f32.mrf.mxu0
    %838 = vdwg.mxu0
    %839 = vmatpush.bf16.msra.mxu0 %v683
    %840 = vmatpush.bf16.msra.mxu0 %v681
    %841 = vmatpush.bf16.msra.mxu0 %v679
    %842 = vmatpush.bf16.msra.mxu0 %v677
    %843 = vmatpush.bf16.msra.mxu0 %v675
    %844 = vmatpush.bf16.msra.mxu0 %v673
    %845 = vmatpush.bf16.msra.mxu0 %v671
    %846 = vmatpush.bf16.msra.mxu0 %v669
    %847 = vmatmul.bf16.gmra.mxu0 %v357
    %v848 = vpop.f32.mrf.mxu0
    %v849 = vadd.f32 %v836, %v848
    %v850 = vpop.f32.mrf.mxu0
    %851 = vdwg.mxu0
    %v852 = vmax.f32 %v797, 0.0
    %v853 = vmax.f32 %v849, 0.0
    %v854 = vpack.c.bf16 %v852, %v852
    %v855 = vpack.c.bf16 %v853, %v853
    %v856 = vld [vmem:[#allocation6] sm:$0xf]
    %v857 = vld [vmem:[#allocation6 + $0x4] sm:$0xf]
    %v858 = vld [vmem:[#allocation6 + $0x8] sm:$0xf]
    %v859 = vld [vmem:[#allocation6 + $0xc] sm:$0xf]
    %v860 = vld [vmem:[#allocation6 + $0x10] sm:$0xf]
    %v861 = vld [vmem:[#allocation6 + $0x14] sm:$0xf]
    %v862 = vld [vmem:[#allocation6 + $0x18] sm:$0xf]
    %v863 = vld [vmem:[#allocation6 + $0x1c] sm:$0xf]
    %v864 = vld [vmem:[#allocation6 + $0x20] sm:$0xf]
    %v865 = vld [vmem:[#allocation6 + $0x24] sm:$0xf]
    %v866 = vld [vmem:[#allocation6 + $0x28] sm:$0xf]
    %v867 = vld [vmem:[#allocation6 + $0x2c] sm:$0xf]
    %v868 = vld [vmem:[#allocation6 + $0x30] sm:$0xf]
    %v869 = vld [vmem:[#allocation6 + $0x34] sm:$0xf]
    %v870 = vld [vmem:[#allocation6 + $0x38] sm:$0xf]
    %v871 = vld [vmem:[#allocation6 + $0x3c] sm:$0xf]
    %v872 = vld [vmem:[#allocation6 + $0x40] sm:$0xf]
    %v873 = vld [vmem:[#allocation6 + $0x44] sm:$0xf]
    %v874 = vld [vmem:[#allocation6 + $0x48] sm:$0xf]
    %v875 = vld [vmem:[#allocation6 + $0x4c] sm:$0xf]
    %v876 = vld [vmem:[#allocation6 + $0x50] sm:$0xf]
    %v877 = vld [vmem:[#allocation6 + $0x54] sm:$0xf]
    %v878 = vld [vmem:[#allocation6 + $0x58] sm:$0xf]
    %v879 = vld [vmem:[#allocation6 + $0x5c] sm:$0xf]
    %v880 = vld [vmem:[#allocation6 + $0x60] sm:$0xf]
    %v881 = vld [vmem:[#allocation6 + $0x64] sm:$0xf]
    %v882 = vld [vmem:[#allocation6 + $0x68] sm:$0xf]
    %v883 = vld [vmem:[#allocation6 + $0x6c] sm:$0xf]
    %v884 = vld [vmem:[#allocation6 + $0x70] sm:$0xf]
    %v885 = vld [vmem:[#allocation6 + $0x74] sm:$0xf]
    %v886 = vld [vmem:[#allocation6 + $0x78] sm:$0xf]
    %v887 = vld [vmem:[#allocation6 + $0x7c] sm:$0xf]
    %v888 = vld [vmem:[%s6] sm:$0x1]
    %v890 = vperm.slane %v888, 0
    %v924 = vunpack.c.l.b16 %v856
    %v925 = vunpack.c.l.b16 %v857
    %v926 = vunpack.c.l.b16 %v858
    %v927 = vunpack.c.l.b16 %v859
    %v928 = vunpack.c.l.b16 %v860
    %v929 = vunpack.c.l.b16 %v861
    %v930 = vunpack.c.l.b16 %v862
    %v931 = vunpack.c.l.b16 %v863
    %v932 = vunpack.c.l.b16 %v864
    %v933 = vunpack.c.l.b16 %v865
    %v934 = vunpack.c.l.b16 %v866
    %v935 = vunpack.c.l.b16 %v867
    %v936 = vunpack.c.l.b16 %v868
    %v937 = vunpack.c.l.b16 %v869
    %v938 = vunpack.c.l.b16 %v870
    %v939 = vunpack.c.l.b16 %v871
    %v940 = vunpack.c.l.b16 %v872
    %v941 = vunpack.c.l.b16 %v873
    %v942 = vunpack.c.l.b16 %v874
    %v943 = vunpack.c.l.b16 %v875
    %v944 = vunpack.c.l.b16 %v876
    %v945 = vunpack.c.l.b16 %v877
    %v946 = vunpack.c.l.b16 %v878
    %v947 = vunpack.c.l.b16 %v879
    %v948 = vunpack.c.l.b16 %v880
    %v949 = vunpack.c.l.b16 %v881
    %v950 = vunpack.c.l.b16 %v882
    %v951 = vunpack.c.l.b16 %v883
    %v952 = vunpack.c.l.b16 %v884
    %v953 = vunpack.c.l.b16 %v885
    %v954 = vunpack.c.l.b16 %v886
    %v955 = vunpack.c.l.b16 %v887
    %v956 = vpack.c.b16 %v925, %v924
    %v957 = vpack.c.b16 %v927, %v926
    %v958 = vpack.c.b16 %v929, %v928
    %v959 = vpack.c.b16 %v931, %v930
    %v960 = vpack.c.b16 %v933, %v932
    %v961 = vpack.c.b16 %v935, %v934
    %v962 = vpack.c.b16 %v937, %v936
    %v963 = vpack.c.b16 %v939, %v938
    %v964 = vpack.c.b16 %v941, %v940
    %v965 = vpack.c.b16 %v943, %v942
    %v966 = vpack.c.b16 %v945, %v944
    %v967 = vpack.c.b16 %v947, %v946
    %v968 = vpack.c.b16 %v949, %v948
    %v969 = vpack.c.b16 %v951, %v950
    %v970 = vpack.c.b16 %v953, %v952
    %v971 = vpack.c.b16 %v955, %v954
    %988 = vmatpush.bf16.msra.mxu0 %v963
    %989 = vmatpush.bf16.msra.mxu0 %v962
    %990 = vmatpush.bf16.msra.mxu0 %v961
    %991 = vmatpush.bf16.msra.mxu0 %v960
    %992 = vmatpush.bf16.msra.mxu0 %v959
    %993 = vmatpush.bf16.msra.mxu0 %v958
    %994 = vmatpush.bf16.msra.mxu0 %v957
    %995 = vmatpush.bf16.msra.mxu0 %v956
    %996 = vmatmul.bf16.gmra.mxu0 %v854
    %v997 = vpop.f32.mrf.mxu0
    %v998 = vadd.f32 %v890, %v997
    %v999 = vpop.f32.mrf.mxu0
    %1000 = vdwg.mxu0
    %1001 = vmatpush.bf16.msra.mxu0 %v971
    %1002 = vmatpush.bf16.msra.mxu0 %v970
    %1003 = vmatpush.bf16.msra.mxu0 %v969
    %1004 = vmatpush.bf16.msra.mxu0 %v968
    %1005 = vmatpush.bf16.msra.mxu0 %v967
    %1006 = vmatpush.bf16.msra.mxu0 %v966
    %1007 = vmatpush.bf16.msra.mxu0 %v965
    %1008 = vmatpush.bf16.msra.mxu0 %v964
    %1009 = vmatmul.bf16.gmra.mxu0 %v855
    %v1010 = vpop.f32.mrf.mxu0
    %v1011 = vadd.f32 %v998, %v1010
    %v1012 = vpop.f32.mrf.mxu0
    %1013 = vdwg.mxu0
    %v1014 = vmax.f32 %v1011, 0.0
    %v1015 = vpack.c.bf16 %v1014, %v1014
    %v1016 = vld [vmem:[#allocation7] sm:$0xf]
    %v1017 = vld [vmem:[#allocation7 + $0x4] sm:$0xf]
    %v1018 = vld [vmem:[#allocation7 + $0x8] sm:$0xf]
    %v1019 = vld [vmem:[#allocation7 + $0xc] sm:$0xf]
    %v1020 = vld [vmem:[#allocation7 + $0x10] sm:$0xf]
    %v1021 = vld [vmem:[#allocation7 + $0x14] sm:$0xf]
    %v1022 = vld [vmem:[#allocation7 + $0x18] sm:$0xf]
    %v1023 = vld [vmem:[#allocation7 + $0x1c] sm:$0xf]
    %v1024 = vld [vmem:[#allocation7 + $0x20] sm:$0xf]
    %v1025 = vld [vmem:[#allocation7 + $0x24] sm:$0xf]
    %v1026 = vld [vmem:[#allocation7 + $0x28] sm:$0xf]
    %v1027 = vld [vmem:[#allocation7 + $0x2c] sm:$0xf]
    %v1028 = vld [vmem:[#allocation7 + $0x30] sm:$0xf]
    %v1029 = vld [vmem:[#allocation7 + $0x34] sm:$0xf]
    %v1030 = vld [vmem:[#allocation7 + $0x38] sm:$0xf]
    %v1031 = vld [vmem:[#allocation7 + $0x3c] sm:$0xf]
    %v1032 = vld [vmem:[%s8] sm:$0x1]
    %v1034 = vperm.slane %v1032, 0
    %v1052 = vunpack.c.l.b16 %v1016
    %v1053 = vunpack.c.l.b16 %v1017
    %v1054 = vunpack.c.l.b16 %v1018
    %v1055 = vunpack.c.l.b16 %v1019
    %v1056 = vunpack.c.l.b16 %v1020
    %v1057 = vunpack.c.l.b16 %v1021
    %v1058 = vunpack.c.l.b16 %v1022
    %v1059 = vunpack.c.l.b16 %v1023
    %v1060 = vunpack.c.l.b16 %v1024
    %v1061 = vunpack.c.l.b16 %v1025
    %v1062 = vunpack.c.l.b16 %v1026
    %v1063 = vunpack.c.l.b16 %v1027
    %v1064 = vunpack.c.l.b16 %v1028
    %v1065 = vunpack.c.l.b16 %v1029
    %v1066 = vunpack.c.l.b16 %v1030
    %v1067 = vunpack.c.l.b16 %v1031
    %v1068 = vpack.c.b16 %v1053, %v1052
    %v1069 = vpack.c.b16 %v1055, %v1054
    %v1070 = vpack.c.b16 %v1057, %v1056
    %v1071 = vpack.c.b16 %v1059, %v1058
    %v1072 = vpack.c.b16 %v1061, %v1060
    %v1073 = vpack.c.b16 %v1063, %v1062
    %v1074 = vpack.c.b16 %v1065, %v1064
    %v1075 = vpack.c.b16 %v1067, %v1066
    %1084 = vmatpush.bf16.msra.mxu0 %v1075
    %1085 = vmatpush.bf16.msra.mxu0 %v1074
    %1086 = vmatpush.bf16.msra.mxu0 %v1073
    %1087 = vmatpush.bf16.msra.mxu0 %v1072
    %1088 = vmatpush.bf16.msra.mxu0 %v1071
    %1089 = vmatpush.bf16.msra.mxu0 %v1070
    %1090 = vmatpush.bf16.msra.mxu0 %v1069
    %1091 = vmatpush.bf16.msra.mxu0 %v1068
    %1092 = vmatmul.bf16.gmra.mxu0 %v1015
    %v1093 = vpop.f32.mrf.mxu0
    %v1094 = vadd.f32 %v1034, %v1093
    %v1095 = vpop.f32.mrf.mxu0
    %1096 = vdwg.mxu0
    %1097 = vst [vmem:[%s9] sm:$0xff] %v1094
    // Predicated region
    $region54: #{xam_loc_solo_forward.1} parent=1 // pred_check
      _
    $region55: #{xam_loc_solo_forward.1} parent=1 // pred_check_branch
      %1099 = sbr.rel (0) target = $region57
    $region56: #{xam_loc_solo_forward.1} parent=1 // pred_region
      _
    $region57: #{xam_loc_solo_forward.1} parent=1 // pred_fallthru
      _
    // Predicated region
    $region58: #{xam_loc_solo_forward.1} parent=1 // pred_check
      _
    $region59: #{xam_loc_solo_forward.1} parent=1 // pred_check_branch
      %1101 = sbr.rel (0) target = $region61
    $region60: #{xam_loc_solo_forward.1} parent=1 // pred_region
      _
    $region61: #{xam_loc_solo_forward.1} parent=1 // pred_fallthru
      _
    %1102 = vsyncpa [#allocation3], 1
    %1103 = vsyncpa [#allocation5], 1
    %1104 = vsyncpa [#allocation8], 1

</llo_original>
